<compile_context>
chip_gen: v7x
topology: tpu7x:2x2x1
jax: 0.10.0
libtpu: 0.0.40
codegen_flags: <defaults>
</compile_context>

<pallas_src>
import functools

import jax
import jax.numpy as jnp
from jax import lax
from jax.experimental import pallas as pl
from jax.experimental.pallas import tpu as pltpu


def _lane_shift(x, shift):
    """Cyclic shift along the last (lane) axis: out[..., m] = x[..., (m + shift) % S].

    Implemented with static slices + concat (unambiguous semantics). Wrapped lanes are
    zeroed by the caller's border mask, so the wrap-around never reaches the output.
    """
    S = x.shape[-1]
    shift = shift % S
    if shift == 0:
        return x
    return jnp.concatenate([x[..., shift:], x[..., :shift]], axis=-1)


def _ghost_kernel(x_ref, w_ref, b_ref, mask_ref, o_ref, slab_ref, *, K, P, W, Cin_pad):
    # x_ref    : (1, Cin_pad, S)        one image, channels x flat spatial (S = H*W)
    # w_ref    : (Cout, K*K*Cin_pad)    merged [primary ; cheap] weights, BN scale folded in
    # b_ref    : (Cout, 1)              folded conv bias + BN shift for both branches
    # mask_ref : (K*K, S)               1.0 where the tap reads inside the image, else 0.0
    # o_ref    : (1, Cout, S)           fused output (rows 0:Ch primary, Ch:2Ch cheap)
    # slab_ref : (K*K*Cin_pad, S)       tap-major im2col slab (fully rewritten every step)
    x = x_ref[0]
    mask = mask_ref[...]

    # Build the im2col slab: each tap is a lane-dense cyclic shift of the resident input
    # tile (lane relayout, off the store-critical path), zero-masked at the image border.
    for ky in range(K):
        for kx in range(K):
            t = ky * K + kx
            shift = (ky - P) * W + (kx - P)
            slab_ref[t * Cin_pad:(t + 1) * Cin_pad, :] = (
                _lane_shift(x, shift) * mask[t][None, :])

    # One deep-contraction matmul over all taps and channels; f32 accumulation on the MXU.
    acc = jnp.dot(w_ref[...], slab_ref[...], preferred_element_type=jnp.float32)

    # Epilogue: bias + ReLU only (BN scale already folded); lane-dense full-block store.
    o_ref[0] = jnp.maximum(acc + b_ref[...], 0.0).astype(o_ref.dtype)


def ghost_conv2d(x_nchw, params, *, kernel_size, padding, stride=1,
                 compute_dtype=jnp.float32):
    """Forward pass of GhostConv2d (eval-mode BN). Input/output are NCHW; output is f32."""
    K, P = kernel_size, padding
    assert stride == 1, "GhostConv2d Pallas kernel supports stride=1 only"
    assert K == 2 * P + 1, "channel concat / centre-tap merge requires K == 2*padding + 1"

    N, Cin, H, W = x_nchw.shape
    S = H * W

    wp = params["wp"]            # (Ch, Cin, K, K)  PyTorch OIHW
    bp = params["bp"]            # (Ch,)
    wc = params["wc"]            # (Ch, Cin, 1, 1)
    bc = params["bc"]            # (Ch,)
    Ch = wp.shape[0]
    Cout = 2 * Ch
    eps = 1e-5

    # Sublane granule so slab / weight row-groups start on sublane boundaries.
    granule = 8 if jnp.dtype(compute_dtype).itemsize == 4 else 16
    Cin_pad = ((Cin + granule - 1) // granule) * granule

    # ---- fold eval-mode BN: scale into weights, shift + conv-bias into a single bias ----
    sp = params["bn_p"]["gamma"] / jnp.sqrt(params["bn_p"]["var"] + eps)
    sc = params["bn_c"]["gamma"] / jnp.sqrt(params["bn_c"]["var"] + eps)
    bpf = (bp - params["bn_p"]["mean"]) * sp + params["bn_p"]["beta"]
    bcf = (bc - params["bn_c"]["mean"]) * sc + params["bn_c"]["beta"]

    # Primary: OIHW -> (Ch, K, K, Cin) -> pad Cin to granule -> tap-major flat, BN folded.
    wp_t = jnp.pad(jnp.transpose(wp, (0, 2, 3, 1)),
                   ((0, 0), (0, 0), (0, 0), (0, Cin_pad - Cin)))
    wp_flat = wp_t.reshape(Ch, K * K * Cin_pad) * sp[:, None]
    # Cheap 1x1: placed only in the centre-tap rows (centre tap reads the unshifted image).
    wc_full = jnp.zeros((Ch, K * K, Cin_pad), jnp.float32)
    wc_full = wc_full.at[:, P * K + P, :Cin].set(wc[:, :, 0, 0] * sc[:, None])
    wc_flat = wc_full.reshape(Ch, K * K * Cin_pad)

    w_comb = jnp.concatenate([wp_flat, wc_flat], axis=0).astype(compute_dtype)  # (Cout, KKC)
    b_comb = jnp.concatenate([bpf, bcf])[:, None].astype(jnp.float32)           # (Cout, 1)

    # Border masks, one row per tap: 1.0 where (y+ky-P, x+kx-P) lies inside the image.
    yy, xx = jnp.meshgrid(jnp.arange(H), jnp.arange(W), indexing="ij")
    rows = []
    for ky in range(K):
        for kx in range(K):
            dy, dx = ky - P, kx - P
            ok = (yy + dy >= 0) & (yy + dy < H) & (xx + dx >= 0) & (xx + dx < W)
            rows.append(ok.reshape(-1))
    masks = jnp.stack(rows).astype(compute_dtype)                               # (K*K, S)

    # NCHW -> (N, Cin_pad, S): a free contiguous reshape + zero channel pad (no transpose,
    # no HBM-side spatial padding, no in-kernel pad scratch).
    x_flat = x_nchw.reshape(N, Cin, S)
    if Cin_pad != Cin:
        x_flat = jnp.pad(x_flat, ((0, 0), (0, Cin_pad - Cin), (0, 0)))
    x_flat = x_flat.astype(compute_dtype)

    kernel = functools.partial(_ghost_kernel, K=K, P=P, W=W, Cin_pad=Cin_pad)

    out = pl.pallas_call(
        kernel,
        out_shape=jax.ShapeDtypeStruct((N, Cout, S), jnp.float32),
        grid_spec=pltpu.PrefetchScalarGridSpec(
            num_scalar_prefetch=0,
            grid=(N,),
            in_specs=[
                pl.BlockSpec((1, Cin_pad, S), lambda n: (n, 0, 0)),
                pl.BlockSpec((Cout, K * K * Cin_pad), lambda n: (0, 0)),
                pl.BlockSpec((Cout, 1), lambda n: (0, 0)),
                pl.BlockSpec((K * K, S), lambda n: (0, 0)),
            ],
            out_specs=pl.BlockSpec((1, Cout, S), lambda n: (n, 0, 0)),
            scratch_shapes=[pltpu.VMEM((K * K * Cin_pad, S), compute_dtype)],
        ),
        compiler_params=pltpu.CompilerParams(dimension_semantics=("parallel",)),
    )(x_flat, w_comb, b_comb, masks)

    # (N, Cout, S) -> (N, Cout, H, W) is a free contiguous reshape: already NCHW.
    return out.reshape(N, Cout, H, W)


def _reference(x_nchw, params, *, kernel_size, padding):
    """Pure-JAX reference (matches PyTorch eval-mode forward)."""
    def branch(w, b, bn, pad):
        y = lax.conv_general_dilated(
            x_nchw, w, window_strides=(1, 1),
            padding=((pad, pad), (pad, pad)),
            dimension_numbers=("NCHW", "OIHW", "NCHW"))
        y = y + b[None, :, None, None]
        s = bn["gamma"] / jnp.sqrt(bn["var"] + 1e-5)
        y = (y - bn["mean"][None, :, None, None]) * s[None, :, None, None] \
            + bn["beta"][None, :, None, None]
        return jnp.maximum(y, 0.0)

    a = branch(params["wp"], params["bp"], params["bn_p"], padding)
    b = branch(params["wc"], params["bc"], params["bn_c"], 0)
    return jnp.concatenate([a, b], axis=1)


def _make_params(key, in_channels, out_channels, kernel_size):
    Ch = out_channels // 2
    ks = jax.random.split(key, 8)
    bn = lambda kg, kb, km, kv: {
        "gamma": 0.5 + jax.random.uniform(kg, (Ch,), jnp.float32),
        "beta": 0.1 * jax.random.normal(kb, (Ch,), jnp.float32),
        "mean": 0.1 * jax.random.normal(km, (Ch,), jnp.float32),
        "var": 0.5 + jax.random.uniform(kv, (Ch,), jnp.float32),
    }
    return {
        "wp": 0.1 * jax.random.normal(ks[0], (Ch, in_channels, kernel_size, kernel_size), jnp.float32),
        "bp": 0.1 * jax.random.normal(ks[1], (Ch,), jnp.float32),
        "wc": 0.1 * jax.random.normal(ks[2], (Ch, in_channels, 1, 1), jnp.float32),
        "bc": 0.1 * jax.random.normal(ks[3], (Ch,), jnp.float32),
        "bn_p": bn(*jax.random.split(ks[4], 4)),
        "bn_c": bn(*jax.random.split(ks[5], 4)),
    }


if __name__ == "__main__":
    key = jax.random.PRNGKey(0)
    k_x, k_p = jax.random.split(key)

    N, Cin, H, W = 2, 4, 16, 16
    out_channels, kernel_size, padding = 8, 3, 1

    x = jax.random.normal(k_x, (N, Cin, H, W), jnp.float32)
    params = _make_params(k_p, Cin, out_channels, kernel_size)

    ref = _reference(x, params, kernel_size=kernel_size, padding=padding)

    # f32 compute path: bit-tight comparison against the reference.
    out = ghost_conv2d(x, params, kernel_size=kernel_size, padding=padding)
    out = jax.block_until_ready(out)
    assert out.shape == (N, out_channels, H, W)
    assert jnp.allclose(out, ref, atol=1e-4, rtol=1e-4), "f32 mismatch vs reference"

    # bf16 compute path (v6e/v7x bandwidth/MXU option): looser tolerance vs the f32 reference.
    out_bf16 = ghost_conv2d(x, params, kernel_size=kernel_size, padding=padding,
                            compute_dtype=jnp.bfloat16)
    out_bf16 = jax.block_until_ready(out_bf16)
    assert jnp.allclose(out_bf16, ref, atol=1e-1, rtol=1e-1), "bf16 mismatch vs reference"

    print("KERNEL_OK")
</pallas_src>

<mosaic_0001>
module attributes {stable_mosaic.version = 11 : i64} {
  func.func @_ghost_kernel(%arg0: i32, %arg1: memref<1x8x256xf32, #tpu.memory_space<vmem>>, %arg2: memref<8x72xf32, #tpu.memory_space<vmem>>, %arg3: memref<8x1xf32, #tpu.memory_space<vmem>>, %arg4: memref<9x256xf32, #tpu.memory_space<vmem>>, %arg5: memref<1x8x256xf32, #tpu.memory_space<vmem>>, %arg6: memref<72x256xf32, #tpu.memory_space<vmem>>) attributes {dimension_semantics = [#tpu.dimension_semantics<parallel>], iteration_bounds = array<i64: 2>, scalar_prefetch = 0 : i64, scratch_operands = 1 : i64, tpu.core_type = #tpu.core_type<tc>, window_params = [{transform_indices = @transform_0, window_bounds = array<i64: 1, 8, 256>}, {pipeline_mode = #tpu.pipeline_mode<synchronous>, transform_indices = @transform_1, window_bounds = array<i64: 8, 72>}, {pipeline_mode = #tpu.pipeline_mode<synchronous>, transform_indices = @transform_2, window_bounds = array<i64: 8, 1>}, {pipeline_mode = #tpu.pipeline_mode<synchronous>, transform_indices = @transform_3, window_bounds = array<i64: 9, 256>}, {transform_indices = @transform_4, window_bounds = array<i64: 1, 8, 256>}]} {
    %c0 = arith.constant 0 : index
    %c0_0 = arith.constant 0 : index
    %c0_1 = arith.constant 0 : index
    %0 = vector.load %arg1[%c0, %c0_0, %c0_1] : memref<1x8x256xf32, #tpu.memory_space<vmem>>, vector<1x8x256xf32>
    %1 = vector.shape_cast %0 : vector<1x8x256xf32> to vector<8x256xf32>
    %c0_2 = arith.constant 0 : index
    %c0_3 = arith.constant 0 : index
    %2 = vector.load %arg4[%c0_2, %c0_3] : memref<9x256xf32, #tpu.memory_space<vmem>>, vector<9x256xf32>
    %3 = vector.extract_strided_slice %1 {offsets = [0, 239], sizes = [8, 17], strides = [1, 1]} : vector<8x256xf32> to vector<8x17xf32>
    %4 = vector.extract_strided_slice %1 {offsets = [0, 0], sizes = [8, 239], strides = [1, 1]} : vector<8x256xf32> to vector<8x239xf32>
    %5 = tpu.concatenate %3, %4 in 1 : vector<8x17xf32>, vector<8x239xf32> -> vector<8x256xf32>
    %6 = vector.extract_strided_slice %2 {offsets = [0, 0], sizes = [1, 256], strides = [1, 1]} : vector<9x256xf32> to vector<1x256xf32>
    %7 = vector.shape_cast %6 : vector<1x256xf32> to vector<256xf32>
    %8 = vector.shape_cast %7 : vector<256xf32> to vector<1x256xf32>
    %9 = vector.broadcast %8 : vector<1x256xf32> to vector<8x256xf32>
    %10 = arith.mulf %5, %9 : vector<8x256xf32>
    %c0_4 = arith.constant 0 : index
    %c0_5 = arith.constant 0 : index
    %11 = vector.load %arg6[%c0_4, %c0_5] : memref<72x256xf32, #tpu.memory_space<vmem>>, vector<8x256xf32>
    tpu.vector_store %arg6[%c0_4, %c0_5], %10 {strides = array<i32>} : memref<72x256xf32, #tpu.memory_space<vmem>>, vector<8x256xf32>,
    %12 = vector.extract_strided_slice %1 {offsets = [0, 240], sizes = [8, 16], strides = [1, 1]} : vector<8x256xf32> to vector<8x16xf32>
    %13 = vector.extract_strided_slice %1 {offsets = [0, 0], sizes = [8, 240], strides = [1, 1]} : vector<8x256xf32> to vector<8x240xf32>
    %14 = tpu.concatenate %12, %13 in 1 : vector<8x16xf32>, vector<8x240xf32> -> vector<8x256xf32>
    %15 = vector.extract_strided_slice %2 {offsets = [1, 0], sizes = [1, 256], strides = [1, 1]} : vector<9x256xf32> to vector<1x256xf32>
    %16 = vector.shape_cast %15 : vector<1x256xf32> to vector<256xf32>
    %17 = vector.shape_cast %16 : vector<256xf32> to vector<1x256xf32>
    %18 = vector.broadcast %17 : vector<1x256xf32> to vector<8x256xf32>
    %19 = arith.mulf %14, %18 : vector<8x256xf32>
    %c8 = arith.constant 8 : index
    %c0_6 = arith.constant 0 : index
    %20 = vector.load %arg6[%c8, %c0_6] : memref<72x256xf32, #tpu.memory_space<vmem>>, vector<8x256xf32>
    tpu.vector_store %arg6[%c8, %c0_6], %19 {strides = array<i32>} : memref<72x256xf32, #tpu.memory_space<vmem>>, vector<8x256xf32>,
    %21 = vector.extract_strided_slice %1 {offsets = [0, 241], sizes = [8, 15], strides = [1, 1]} : vector<8x256xf32> to vector<8x15xf32>
    %22 = vector.extract_strided_slice %1 {offsets = [0, 0], sizes = [8, 241], strides = [1, 1]} : vector<8x256xf32> to vector<8x241xf32>
    %23 = tpu.concatenate %21, %22 in 1 : vector<8x15xf32>, vector<8x241xf32> -> vector<8x256xf32>
    %24 = vector.extract_strided_slice %2 {offsets = [2, 0], sizes = [1, 256], strides = [1, 1]} : vector<9x256xf32> to vector<1x256xf32>
    %25 = vector.shape_cast %24 : vector<1x256xf32> to vector<256xf32>
    %26 = vector.shape_cast %25 : vector<256xf32> to vector<1x256xf32>
    %27 = vector.broadcast %26 : vector<1x256xf32> to vector<8x256xf32>
    %28 = arith.mulf %23, %27 : vector<8x256xf32>
    %c16 = arith.constant 16 : index
    %c0_7 = arith.constant 0 : index
    %29 = vector.load %arg6[%c16, %c0_7] : memref<72x256xf32, #tpu.memory_space<vmem>>, vector<8x256xf32>
    tpu.vector_store %arg6[%c16, %c0_7], %28 {strides = array<i32>} : memref<72x256xf32, #tpu.memory_space<vmem>>, vector<8x256xf32>,
    %30 = vector.extract_strided_slice %1 {offsets = [0, 255], sizes = [8, 1], strides = [1, 1]} : vector<8x256xf32> to vector<8x1xf32>
    %31 = vector.extract_strided_slice %1 {offsets = [0, 0], sizes = [8, 255], strides = [1, 1]} : vector<8x256xf32> to vector<8x255xf32>
    %32 = tpu.concatenate %30, %31 in 1 : vector<8x1xf32>, vector<8x255xf32> -> vector<8x256xf32>
    %33 = vector.extract_strided_slice %2 {offsets = [3, 0], sizes = [1, 256], strides = [1, 1]} : vector<9x256xf32> to vector<1x256xf32>
    %34 = vector.shape_cast %33 : vector<1x256xf32> to vector<256xf32>
    %35 = vector.shape_cast %34 : vector<256xf32> to vector<1x256xf32>
    %36 = vector.broadcast %35 : vector<1x256xf32> to vector<8x256xf32>
    %37 = arith.mulf %32, %36 : vector<8x256xf32>
    %c24 = arith.constant 24 : index
    %c0_8 = arith.constant 0 : index
    %38 = vector.load %arg6[%c24, %c0_8] : memref<72x256xf32, #tpu.memory_space<vmem>>, vector<8x256xf32>
    tpu.vector_store %arg6[%c24, %c0_8], %37 {strides = array<i32>} : memref<72x256xf32, #tpu.memory_space<vmem>>, vector<8x256xf32>,
    %39 = vector.extract_strided_slice %2 {offsets = [4, 0], sizes = [1, 256], strides = [1, 1]} : vector<9x256xf32> to vector<1x256xf32>
    %40 = vector.shape_cast %39 : vector<1x256xf32> to vector<256xf32>
    %41 = vector.shape_cast %40 : vector<256xf32> to vector<1x256xf32>
    %42 = vector.broadcast %41 : vector<1x256xf32> to vector<8x256xf32>
    %43 = arith.mulf %1, %42 : vector<8x256xf32>
    %c32 = arith.constant 32 : index
    %c0_9 = arith.constant 0 : index
    %44 = vector.load %arg6[%c32, %c0_9] : memref<72x256xf32, #tpu.memory_space<vmem>>, vector<8x256xf32>
    tpu.vector_store %arg6[%c32, %c0_9], %43 {strides = array<i32>} : memref<72x256xf32, #tpu.memory_space<vmem>>, vector<8x256xf32>,
    %45 = vector.extract_strided_slice %1 {offsets = [0, 1], sizes = [8, 255], strides = [1, 1]} : vector<8x256xf32> to vector<8x255xf32>
    %46 = vector.extract_strided_slice %1 {offsets = [0, 0], sizes = [8, 1], strides = [1, 1]} : vector<8x256xf32> to vector<8x1xf32>
    %47 = tpu.concatenate %45, %46 in 1 : vector<8x255xf32>, vector<8x1xf32> -> vector<8x256xf32>
    %48 = vector.extract_strided_slice %2 {offsets = [5, 0], sizes = [1, 256], strides = [1, 1]} : vector<9x256xf32> to vector<1x256xf32>
    %49 = vector.shape_cast %48 : vector<1x256xf32> to vector<256xf32>
    %50 = vector.shape_cast %49 : vector<256xf32> to vector<1x256xf32>
    %51 = vector.broadcast %50 : vector<1x256xf32> to vector<8x256xf32>
    %52 = arith.mulf %47, %51 : vector<8x256xf32>
    %c40 = arith.constant 40 : index
    %c0_10 = arith.constant 0 : index
    %53 = vector.load %arg6[%c40, %c0_10] : memref<72x256xf32, #tpu.memory_space<vmem>>, vector<8x256xf32>
    tpu.vector_store %arg6[%c40, %c0_10], %52 {strides = array<i32>} : memref<72x256xf32, #tpu.memory_space<vmem>>, vector<8x256xf32>,
    %54 = vector.extract_strided_slice %1 {offsets = [0, 15], sizes = [8, 241], strides = [1, 1]} : vector<8x256xf32> to vector<8x241xf32>
    %55 = vector.extract_strided_slice %1 {offsets = [0, 0], sizes = [8, 15], strides = [1, 1]} : vector<8x256xf32> to vector<8x15xf32>
    %56 = tpu.concatenate %54, %55 in 1 : vector<8x241xf32>, vector<8x15xf32> -> vector<8x256xf32>
    %57 = vector.extract_strided_slice %2 {offsets = [6, 0], sizes = [1, 256], strides = [1, 1]} : vector<9x256xf32> to vector<1x256xf32>
    %58 = vector.shape_cast %57 : vector<1x256xf32> to vector<256xf32>
    %59 = vector.shape_cast %58 : vector<256xf32> to vector<1x256xf32>
    %60 = vector.broadcast %59 : vector<1x256xf32> to vector<8x256xf32>
    %61 = arith.mulf %56, %60 : vector<8x256xf32>
    %c48 = arith.constant 48 : index
    %c0_11 = arith.constant 0 : index
    %62 = vector.load %arg6[%c48, %c0_11] : memref<72x256xf32, #tpu.memory_space<vmem>>, vector<8x256xf32>
    tpu.vector_store %arg6[%c48, %c0_11], %61 {strides = array<i32>} : memref<72x256xf32, #tpu.memory_space<vmem>>, vector<8x256xf32>,
    %63 = vector.extract_strided_slice %1 {offsets = [0, 16], sizes = [8, 240], strides = [1, 1]} : vector<8x256xf32> to vector<8x240xf32>
    %64 = vector.extract_strided_slice %1 {offsets = [0, 0], sizes = [8, 16], strides = [1, 1]} : vector<8x256xf32> to vector<8x16xf32>
    %65 = tpu.concatenate %63, %64 in 1 : vector<8x240xf32>, vector<8x16xf32> -> vector<8x256xf32>
    %66 = vector.extract_strided_slice %2 {offsets = [7, 0], sizes = [1, 256], strides = [1, 1]} : vector<9x256xf32> to vector<1x256xf32>
    %67 = vector.shape_cast %66 : vector<1x256xf32> to vector<256xf32>
    %68 = vector.shape_cast %67 : vector<256xf32> to vector<1x256xf32>
    %69 = vector.broadcast %68 : vector<1x256xf32> to vector<8x256xf32>
    %70 = arith.mulf %65, %69 : vector<8x256xf32>
    %c56 = arith.constant 56 : index
    %c0_12 = arith.constant 0 : index
    %71 = vector.load %arg6[%c56, %c0_12] : memref<72x256xf32, #tpu.memory_space<vmem>>, vector<8x256xf32>
    tpu.vector_store %arg6[%c56, %c0_12], %70 {strides = array<i32>} : memref<72x256xf32, #tpu.memory_space<vmem>>, vector<8x256xf32>,
    %72 = vector.extract_strided_slice %1 {offsets = [0, 17], sizes = [8, 239], strides = [1, 1]} : vector<8x256xf32> to vector<8x239xf32>
    %73 = vector.extract_strided_slice %1 {offsets = [0, 0], sizes = [8, 17], strides = [1, 1]} : vector<8x256xf32> to vector<8x17xf32>
    %74 = tpu.concatenate %72, %73 in 1 : vector<8x239xf32>, vector<8x17xf32> -> vector<8x256xf32>
    %75 = vector.extract_strided_slice %2 {offsets = [8, 0], sizes = [1, 256], strides = [1, 1]} : vector<9x256xf32> to vector<1x256xf32>
    %76 = vector.shape_cast %75 : vector<1x256xf32> to vector<256xf32>
    %77 = vector.shape_cast %76 : vector<256xf32> to vector<1x256xf32>
    %78 = vector.broadcast %77 : vector<1x256xf32> to vector<8x256xf32>
    %79 = arith.mulf %74, %78 : vector<8x256xf32>
    %c64 = arith.constant 64 : index
    %c0_13 = arith.constant 0 : index
    %80 = vector.load %arg6[%c64, %c0_13] : memref<72x256xf32, #tpu.memory_space<vmem>>, vector<8x256xf32>
    tpu.vector_store %arg6[%c64, %c0_13], %79 {strides = array<i32>} : memref<72x256xf32, #tpu.memory_space<vmem>>, vector<8x256xf32>,
    %c0_14 = arith.constant 0 : index
    %c0_15 = arith.constant 0 : index
    %81 = vector.load %arg2[%c0_14, %c0_15] : memref<8x72xf32, #tpu.memory_space<vmem>>, vector<8x72xf32>
    %c0_16 = arith.constant 0 : index
    %c0_17 = arith.constant 0 : index
    %82 = vector.load %arg6[%c0_16, %c0_17] : memref<72x256xf32, #tpu.memory_space<vmem>>, vector<72x256xf32>
    %cst = arith.constant dense<0.000000e+00> : vector<8x256xf32>
    %83 = tpu.matmul %81, %82, %cst {dimension_numbers = #tpu.dot_dimension_numbers<[1], [0], [0], [1], [0, 0, 1, 1], [], []>} : vector<8x72xf32>, vector<72x256xf32>, vector<8x256xf32> -> vector<8x256xf32>
    %c0_18 = arith.constant 0 : index
    %c0_19 = arith.constant 0 : index
    %84 = vector.load %arg3[%c0_18, %c0_19] : memref<8x1xf32, #tpu.memory_space<vmem>>, vector<8x1xf32>
    %85 = vector.broadcast %84 : vector<8x1xf32> to vector<8x256xf32>
    %86 = arith.addf %83, %85 : vector<8x256xf32>
    %cst_20 = arith.constant 0.000000e+00 : f32
    %87 = vector.broadcast %cst_20 : f32 to vector<8x256xf32>
    %88 = arith.maximumf %86, %87 : vector<8x256xf32>
    %c0_21 = arith.constant 0 : index
    %c0_22 = arith.constant 0 : index
    %c0_23 = arith.constant 0 : index
    %89 = vector.load %arg5[%c0_21, %c0_22, %c0_23] : memref<1x8x256xf32, #tpu.memory_space<vmem>>, vector<1x8x256xf32>
    %90 = vector.shape_cast %89 : vector<1x8x256xf32> to vector<8x256xf32>
    %91 = vector.shape_cast %88 : vector<8x256xf32> to vector<1x8x256xf32>
    tpu.vector_store %arg5[%c0_21, %c0_22, %c0_23], %91 {strides = array<i32>} : memref<1x8x256xf32, #tpu.memory_space<vmem>>, vector<1x8x256xf32>,
    return
  }
  func.func @transform_0(%arg0: i32) -> (i32, i32, i32) {
    %c0_i32 = arith.constant 0 : i32
    %c0_i32_0 = arith.constant 0 : i32
    %c0_i32_1 = arith.constant 0 : i32
    return %arg0, %c0_i32, %c0_i32_0 : i32, i32, i32
  }
  func.func @transform_1(%arg0: i32) -> (i32, i32) {
    %c0_i32 = arith.constant 0 : i32
    %c0_i32_0 = arith.constant 0 : i32
    %c0_i32_1 = arith.constant 0 : i32
    return %c0_i32, %c0_i32_0 : i32, i32
  }
  func.func @transform_2(%arg0: i32) -> (i32, i32) {
    %c0_i32 = arith.constant 0 : i32
    %c0_i32_0 = arith.constant 0 : i32
    %c0_i32_1 = arith.constant 0 : i32
    return %c0_i32, %c0_i32_0 : i32, i32
  }
  func.func @transform_3(%arg0: i32) -> (i32, i32) {
    %c0_i32 = arith.constant 0 : i32
    %c0_i32_0 = arith.constant 0 : i32
    %c0_i32_1 = arith.constant 0 : i32
    return %c0_i32, %c0_i32_0 : i32, i32
  }
  func.func @transform_4(%arg0: i32) -> (i32, i32, i32) {
    %c0_i32 = arith.constant 0 : i32
    %c0_i32_0 = arith.constant 0 : i32
    %c0_i32_1 = arith.constant 0 : i32
    return %arg0, %c0_i32, %c0_i32_0 : i32, i32, i32
  }
}

</mosaic_0001>

<llo_original>
// kernel: tpu_custom_call.1
$region0: #{tpu_custom_call.1}
  #allocation0 [shape = 'u32[]', space=smem, size = 0x4, offset = 0x4, fixed_abs, tag = 'smem constant byte address 0x4 - core index']
  #allocation1 [shape = 'u32[144,128]{1,0:T(1,128)}', space=vmem, size = 0x12000, scoped, tag = 'internal scratch']
  #allocation2 [shape = 'f32[72,256]{1,0:T(8,128)}', space=vmem, size = 0x12000, scoped, tag = 'scratch operand']
  %s0 = inlined_call_operand.hbm [shape: f32[2,8,256], index: 0, kind: input, shape index: {}]
  %s1 = inlined_call_operand.vmem [shape: f32[8,72], index: 1, kind: input, shape index: {}]
  %s2 = inlined_call_operand.vmem [shape: f32[8,1], index: 2, kind: input, shape index: {}]
  %s3 = inlined_call_operand.hbm [shape: f32[9,256], index: 3, kind: input, shape index: {}]
  %s4 = inlined_call_operand.hbm [shape: f32[2,8,256], index: 4, kind: output, shape index: {}]
  %s5 = sld [smem:[#allocation0]]
  $region57: #{tpu_custom_call.1} parent=0
    _
  %s7 = ssub.s32 1, %s5
  %s8 = scalar_select 0, %s7, %s5
  $region1: #{tpu_custom_call.1} parent=0
    #allocation3 [shape = 'u8[16384]{0}', space=vmem, size = 0x4000, scoped, tag = 'input window, operand 0']
    #allocation4 [shape = 's32[2]{0}', space=sflag, size = 0x8, scoped, tag = 'scoped memory for tpu_custom_call.1']
    #allocation5 [shape = 's32[2]{0}', space=sflag, size = 0x8, scoped, tag = 'scoped memory for tpu_custom_call.1']
    #allocation6 [shape = 'u8[16384]{0}', space=vmem, size = 0x4000, scoped, tag = 'input window, operand 3, single buffered']
    #allocation7 [shape = 's32[1]{0}', space=sflag, size = 0x4, scoped, tag = 'scoped memory for tpu_custom_call.1']
    #allocation8 [shape = 'u8[16384]{0}', space=vmem, size = 0x4000, scoped, tag = 'output window, operand 0']
    %9 = vsyncpa [#allocation4], 0
    %s10 = scalar_lea.sflag [#allocation4], 1
    %11 = vsyncpa %s10, 0
    %12 = vsyncpa [#allocation7], 0
    %13 = vsyncpa [#allocation5], 0
    %s14 = scalar_lea.sflag [#allocation5], 1
    %15 = vsyncpa %s14, 0
    loop: start=0, step=1, limit=4
    $region2: #{tpu_custom_call.1} parent=1 // loop_pre_header
      _
    $region3: #{tpu_custom_call.1} parent=1 // loop_header
      %s17 = sphi 0, %s21
      %p18 = scmp.ge.s32.totalorder %s17, 4
      %s27 = sphi 0, %s29
      %s30 = sphi 0, %s27
      %s31 = sphi 0, %s30
      %s47 = sphi 0, %s31
      %s51 = sphi 0, %s51
      %s53 = sphi 0, %s51
      %s54 = sphi 0, %s53
      %s68 = sphi 0, %s54
      %s72 = sphi 0, %s72
      %s74 = sphi 0, %s72
      %s75 = sphi 0, %s74
      %s89 = sphi 0, %s75
      %s93 = sphi 0, %s93
      %s95 = sphi 0, %s93
      %s96 = sphi 0, %s95
      %s110 = sphi 0, %s96
      %s116 = sphi 0, %s118
      %s119 = sphi 0, %s116
      %s120 = sphi 0, %s119
      %s136 = sphi 0, %s120
    $region4: #{tpu_custom_call.1} parent=1 // loop_header_branch
      %20 = sbr.rel (%p18) target = $region8
    $region5: #{tpu_custom_call.1} parent=1 // loop_body
      %s22 = ssub.s32 %s17, 1
      %s23 = ssub.s32 %s17, 2
      %s24 = sadd.s32 %s17, 1
      %s25 = ssub.s32 %s17, %s24
      %p26 = scmp.eq.s32.totalorder %s25, 0
      %s28 = sadd.s32 %s27, 1
      %s29 = scalar_select %p26, %s27, %s28
      %p32 = pneg %p26
      %p33 = scmp.eq.s32.totalorder %s17, 1
      %p34 = por %p32, %p33
      %p35 = scmp.ne.s32.totalorder %s27, %s30
      %p36 = scmp.eq.s32.totalorder %s17, 0
      %p37 = por %p35, %p36
      %p38 = scmp.ne.s32.totalorder %s27, %s30
      %p39 = scmp.eq.s32.totalorder %s22, 1
      %p40 = por %p38, %p39
      %p41 = scmp.ne.s32.totalorder %s30, %s31
      %p42 = scmp.eq.s32.totalorder %s22, 0
      %p43 = por %p41, %p42
      %p44 = scmp.ne.s32.totalorder %s30, %s31
      %p45 = scmp.eq.s32.totalorder %s23, 1
      %p46 = por %p44, %p45
      %p48 = scmp.ne.s32.totalorder %s31, %s47
      %p49 = scmp.eq.s32.totalorder %s23, 0
      %p50 = por %p48, %p49
      %s52 = sadd.s32 %s51, 1
      %p55 = scmp.eq.s32.totalorder %s17, 1
      %p56 = scmp.ne.s32.totalorder %s51, %s53
      %p57 = scmp.eq.s32.totalorder %s17, 0
      %p58 = por %p56, %p57
      %p59 = scmp.ne.s32.totalorder %s51, %s53
      %p60 = scmp.eq.s32.totalorder %s22, 1
      %p61 = por %p59, %p60
      %p62 = scmp.ne.s32.totalorder %s53, %s54
      %p63 = scmp.eq.s32.totalorder %s22, 0
      %p64 = por %p62, %p63
      %p65 = scmp.ne.s32.totalorder %s53, %s54
      %p66 = scmp.eq.s32.totalorder %s23, 1
      %p67 = por %p65, %p66
      %p69 = scmp.ne.s32.totalorder %s54, %s68
      %p70 = scmp.eq.s32.totalorder %s23, 0
      %p71 = por %p69, %p70
      %s73 = sadd.s32 %s72, 1
      %p76 = scmp.eq.s32.totalorder %s17, 1
      %p77 = scmp.ne.s32.totalorder %s72, %s74
      %p78 = scmp.eq.s32.totalorder %s17, 0
      %p79 = por %p77, %p78
      %p80 = scmp.ne.s32.totalorder %s72, %s74
      %p81 = scmp.eq.s32.totalorder %s22, 1
      %p82 = por %p80, %p81
      %p83 = scmp.ne.s32.totalorder %s74, %s75
      %p84 = scmp.eq.s32.totalorder %s22, 0
      %p85 = por %p83, %p84
      %p86 = scmp.ne.s32.totalorder %s74, %s75
      %p87 = scmp.eq.s32.totalorder %s23, 1
      %p88 = por %p86, %p87
      %p90 = scmp.ne.s32.totalorder %s75, %s89
      %p91 = scmp.eq.s32.totalorder %s23, 0
      %p92 = por %p90, %p91
      %s94 = sadd.s32 %s93, 1
      %p97 = scmp.eq.s32.totalorder %s17, 1
      %p98 = scmp.ne.s32.totalorder %s93, %s95
      %p99 = scmp.eq.s32.totalorder %s17, 0
      %p100 = por %p98, %p99
      %p101 = scmp.ne.s32.totalorder %s93, %s95
      %p102 = scmp.eq.s32.totalorder %s22, 1
      %p103 = por %p101, %p102
      %p104 = scmp.ne.s32.totalorder %s95, %s96
      %p105 = scmp.eq.s32.totalorder %s22, 0
      %p106 = por %p104, %p105
      %p107 = scmp.ne.s32.totalorder %s95, %s96
      %p108 = scmp.eq.s32.totalorder %s23, 1
      %p109 = por %p107, %p108
      %p111 = scmp.ne.s32.totalorder %s96, %s110
      %p112 = scmp.eq.s32.totalorder %s23, 0
      %p113 = por %p111, %p112
      %s114 = ssub.s32 %s17, %s24
      %p115 = scmp.eq.s32.totalorder %s114, 0
      %s117 = sadd.s32 %s116, 1
      %s118 = scalar_select %p115, %s116, %s117
      %p121 = pneg %p115
      %p122 = scmp.eq.s32.totalorder %s17, 1
      %p123 = por %p121, %p122
      %p124 = scmp.ne.s32.totalorder %s116, %s119
      %p125 = scmp.eq.s32.totalorder %s17, 0
      %p126 = por %p124, %p125
      %p127 = scmp.ne.s32.totalorder %s116, %s119
      %p128 = scmp.eq.s32.totalorder %s22, 1
      %p129 = por %p127, %p128
      %p130 = scmp.ne.s32.totalorder %s119, %s120
      %p131 = scmp.eq.s32.totalorder %s22, 0
      %p132 = por %p130, %p131
      %p133 = scmp.ne.s32.totalorder %s119, %s120
      %p134 = scmp.eq.s32.totalorder %s23, 1
      %p135 = por %p133, %p134
      %p137 = scmp.ne.s32.totalorder %s120, %s136
      %p138 = scmp.eq.s32.totalorder %s23, 0
      %p139 = por %p137, %p138
      %p140 = scmp.le.s32.totalorder 1, %s17
      %p141 = scmp.lt.s32.totalorder %s17, 3
      %p142 = pnand %p140, %p141
      %p143 = pneg %p142
      // Predicated region
      $region9: #{tpu_custom_call.1} parent=5 // pred_check
        _
      $region10: #{tpu_custom_call.1} parent=5 // pred_check_branch
        %145 = sbr.rel (%p142) target = $region12
      $region11: #{tpu_custom_call.1} parent=5 // pred_region
        %s146 = ssub.s32 %s17, 1
        // Predicated region
        $region13: #{tpu_custom_call.1} parent=11 // pred_check
          %p147 = pneg %p64
        $region14: #{tpu_custom_call.1} parent=11 // pred_check_branch
          %149 = sbr.rel (%p147) target = $region16
        $region15: #{tpu_custom_call.1} parent=11 // pred_region
          _
        $region16: #{tpu_custom_call.1} parent=11 // pred_fallthru
          _
        // Predicated region
        $region17: #{tpu_custom_call.1} parent=11 // pred_check
          %p150 = pneg %p85
        $region18: #{tpu_custom_call.1} parent=11 // pred_check_branch
          %152 = sbr.rel (%p150) target = $region20
        $region19: #{tpu_custom_call.1} parent=11 // pred_region
          _
        $region20: #{tpu_custom_call.1} parent=11 // pred_fallthru
          _
        // Predicated region
        $region21: #{tpu_custom_call.1} parent=11 // pred_check
          %p153 = pneg %p106
        $region22: #{tpu_custom_call.1} parent=11 // pred_check_branch
          %155 = sbr.rel (%p153) target = $region24
        $region23: #{tpu_custom_call.1} parent=11 // pred_region
          %s157 = ssub.s32 512, 512
          %158 = vsyncadd [#allocation7], %s157
          %s159 = sshll.u32 [#allocation6], 4
          %s160 = int_to_ptr.vmem [resolvable:$true] %s159
          %165 = dma.hbm_to_vmem [thread:$0]  %s3, 512, %s160, [#allocation7], 256, 256, 16
        $region24: #{tpu_custom_call.1} parent=11 // pred_fallthru
          _
      $region12: #{tpu_custom_call.1} parent=5 // pred_fallthru
        _
      %p166 = scmp.lt.s32.totalorder %s17, 2
      // Predicated region
      $region25: #{tpu_custom_call.1} parent=5 // pred_check
        %p167 = pneg %p166
      $region26: #{tpu_custom_call.1} parent=5 // pred_check_branch
        %169 = sbr.rel (%p167) target = $region28
      $region27: #{tpu_custom_call.1} parent=5 // pred_region
        // Predicated region
        $region29: #{tpu_custom_call.1} parent=27 // pred_check
          %p170 = pneg %p37
        $region30: #{tpu_custom_call.1} parent=27 // pred_check_branch
          %172 = sbr.rel (%p170) target = $region32
        $region31: #{tpu_custom_call.1} parent=27 // pred_region
          %s173 = sand.u32 %s27, 1
          %s174 = scalar_lea.sflag [#allocation4], %s173
          %s175 = sand.u32 %s27, 1
          %s176 = smul.addr %s175, 16
          %s177 = scalar_lea.vmem [#allocation3], %s176
          %s179 = ssub.s32 256, 256
          %180 = vsyncadd %s174, %s179
          %s181 = smul.addr %s17, 2
          %s182 = smul.addr %s181, 128
          %s183 = scalar_lea.hbm %s0, %s182
          %s185 = sshll.u32 %s177, 4
          %s186 = int_to_ptr.vmem [resolvable:$true] %s185
          %188 = dma.hbm_to_vmem [thread:$0]  %s183, 256, %s186, %s174
        $region32: #{tpu_custom_call.1} parent=27 // pred_fallthru
          _
      $region28: #{tpu_custom_call.1} parent=5 // pred_fallthru
        _
      %p189 = scmp.le.s32.totalorder 1, %s17
      %p190 = scmp.lt.s32.totalorder %s17, 3
      %p191 = pnand %p189, %p190
      %p192 = pneg %p191
      // Predicated region
      $region33: #{tpu_custom_call.1} parent=5 // pred_check
        _
      $region34: #{tpu_custom_call.1} parent=5 // pred_check_branch
        %194 = sbr.rel (%p191) target = $region36
      $region35: #{tpu_custom_call.1} parent=5 // pred_region
        %s195 = ssub.s32 %s17, 1
        %s196 = sand.u32 %s30, 1
        %s197 = scalar_lea.sflag [#allocation4], %s196
        %s198 = sand.u32 %s30, 1
        %s199 = smul.addr %s198, 16
        %s200 = scalar_lea.vmem [#allocation3], %s199
        // Predicated region
        $region37: #{tpu_custom_call.1} parent=35 // pred_check
          %p201 = pneg %p43
        $region38: #{tpu_custom_call.1} parent=35 // pred_check_branch
          %203 = sbr.rel (%p201) target = $region40
        $region39: #{tpu_custom_call.1} parent=35 // pred_region
          %204 = dma.done %s197, 256
        $region40: #{tpu_custom_call.1} parent=35 // pred_fallthru
          _
        // Predicated region
        $region41: #{tpu_custom_call.1} parent=35 // pred_check
          %p205 = pneg %p106
        $region42: #{tpu_custom_call.1} parent=35 // pred_check_branch
          %207 = sbr.rel (%p205) target = $region44
        $region43: #{tpu_custom_call.1} parent=35 // pred_region
          %208 = dma.done [#allocation7], 512
        $region44: #{tpu_custom_call.1} parent=35 // pred_fallthru
          _
        %s209 = sand.u32 %s30, 1
        %s210 = scalar_lea.sflag [#allocation4], %s209
        %s211 = sand.u32 %s30, 1
        %s212 = smul.addr %s211, 16
        %s213 = scalar_lea.vmem [#allocation3], %s212
        %p214 = pneg %p43
        %p215 = pneg %p40
        %p216 = pneg %p64
        %p217 = pneg %p61
        %p218 = pneg %p85
        %p219 = pneg %p82
        %p220 = pneg %p106
        %p221 = pneg %p103
        %p222 = pneg %p132
        %p223 = pneg %p129
        %s224 = sand.u32 %s119, 1
        %s225 = scalar_lea.sflag [#allocation5], %s224
        %s226 = sand.u32 %s119, 1
        %s227 = smul.addr %s226, 16
        %s228 = scalar_lea.vmem [#allocation8], %s227
        %v229 = vld [vmem:[%s200] sm:$0xff]
        %v230 = vld [vmem:[%s200 + $0x8] sm:$0xff]
        %v231 = vld [vmem:[#allocation6] sm:$0xff]
        %v232 = vld [vmem:[#allocation6 + $0x8] sm:$0xff]
        %v233 = vld [vmem:[#allocation6 + $0x10] sm:$0x1]
        %v234 = vld [vmem:[#allocation6 + $0x18] sm:$0x1]
        %236 = vrot.lane.b32.xlu0 %v230, 17
        %v237 = vpop.permute.xlu0 %236
        %240 = vrot.lane.b32.xlu0 %v229, 17
        %v241 = vpop.permute.xlu0 %240
        %vm242 = vcmask 138240
        %v243 = vsel %vm242, %v241, %v237
        %v246 = vsel %vm242, %v237, %v241
        %v247 = vlaneseq
        %v248 = vshrl.u32 %v247, 7
        %v249 = vsub.s32 0, %v248
        %v250 = vrot.slane %v231, %v249
        %v251 = vlaneseq
        %v252 = vshrl.u32 %v251, 7
        %v253 = vsub.s32 0, %v252
        %v254 = vrot.slane %v232, %v253
        %v255 = vmul.f32 %v246, %v250
        %v256 = vmul.f32 %v243, %v254
        %257 = vst [vmem:[#allocation2] sm:$0xff] %v255
        %258 = vst [vmem:[#allocation2 + $0x8] sm:$0xff] %v256
        %259 = vrot.lane.b32.xlu0 %v230, 16
        %v260 = vpop.permute.xlu0 %259
        %262 = vrot.lane.b32.xlu0 %v229, 16
        %v263 = vpop.permute.xlu0 %262
        %vm264 = vcmask 130048
        %v265 = vsel %vm264, %v263, %v260
        %v268 = vsel %vm264, %v260, %v263
        %v269 = vlaneseq
        %v270 = vshrl.u32 %v269, 7
        %v271 = vsub.s32 1, %v270
        %v272 = vrot.slane %v231, %v271
        %v273 = vlaneseq
        %v274 = vshrl.u32 %v273, 7
        %v275 = vsub.s32 1, %v274
        %v276 = vrot.slane %v232, %v275
        %v277 = vmul.f32 %v268, %v272
        %v278 = vmul.f32 %v265, %v276
        %279 = vst [vmem:[#allocation2 + $0x10] sm:$0xff] %v277
        %280 = vst [vmem:[#allocation2 + $0x18] sm:$0xff] %v278
        %281 = vrot.lane.b32.xlu0 %v230, 15
        %v282 = vpop.permute.xlu0 %281
        %284 = vrot.lane.b32.xlu0 %v229, 15
        %v285 = vpop.permute.xlu0 %284
        %vm286 = vcmask 121856
        %v287 = vsel %vm286, %v285, %v282
        %v290 = vsel %vm286, %v282, %v285
        %v291 = vlaneseq
        %v292 = vshrl.u32 %v291, 7
        %v293 = vsub.s32 2, %v292
        %v294 = vrot.slane %v231, %v293
        %v295 = vlaneseq
        %v296 = vshrl.u32 %v295, 7
        %v297 = vsub.s32 2, %v296
        %v298 = vrot.slane %v232, %v297
        %v299 = vmul.f32 %v290, %v294
        %v300 = vmul.f32 %v287, %v298
        %301 = vst [vmem:[#allocation2 + $0x20] sm:$0xff] %v299
        %302 = vst [vmem:[#allocation2 + $0x28] sm:$0xff] %v300
        %303 = vrot.lane.b32.xlu0 %v230, 1
        %v304 = vpop.permute.xlu0 %303
        %306 = vrot.lane.b32.xlu0 %v229, 1
        %v307 = vpop.permute.xlu0 %306
        %vm308 = vcmask 7168
        %v309 = vsel %vm308, %v307, %v304
        %v312 = vsel %vm308, %v304, %v307
        %v313 = vlaneseq
        %v314 = vshrl.u32 %v313, 7
        %v315 = vsub.s32 3, %v314
        %v316 = vrot.slane %v231, %v315
        %v317 = vlaneseq
        %v318 = vshrl.u32 %v317, 7
        %v319 = vsub.s32 3, %v318
        %v320 = vrot.slane %v232, %v319
        %v321 = vmul.f32 %v312, %v316
        %v322 = vmul.f32 %v309, %v320
        %323 = vst [vmem:[#allocation2 + $0x30] sm:$0xff] %v321
        %324 = vst [vmem:[#allocation2 + $0x38] sm:$0xff] %v322
        %v325 = vlaneseq
        %v326 = vshrl.u32 %v325, 7
        %v327 = vsub.s32 4, %v326
        %v328 = vrot.slane %v231, %v327
        %v329 = vlaneseq
        %v330 = vshrl.u32 %v329, 7
        %v331 = vsub.s32 4, %v330
        %v332 = vrot.slane %v232, %v331
        %v333 = vmul.f32 %v229, %v328
        %v334 = vmul.f32 %v230, %v332
        %335 = vst [vmem:[#allocation2 + $0x40] sm:$0xff] %v333
        %336 = vst [vmem:[#allocation2 + $0x48] sm:$0xff] %v334
        %337 = vrot.lane.b32.xlu0 %v229, 127
        %v338 = vpop.permute.xlu0 %337
        %339 = vrot.lane.b32.xlu0 %v230, 127
        %v340 = vpop.permute.xlu0 %339
        %vm341 = vcmask 1039360
        %v342 = vsel %vm341, %v338, %v340
        %v346 = vsel %vm341, %v340, %v338
        %v347 = vlaneseq
        %v348 = vshrl.u32 %v347, 7
        %v349 = vsub.s32 5, %v348
        %v350 = vrot.slane %v231, %v349
        %v351 = vlaneseq
        %v352 = vshrl.u32 %v351, 7
        %v353 = vsub.s32 5, %v352
        %v354 = vrot.slane %v232, %v353
        %v355 = vmul.f32 %v342, %v350
        %v356 = vmul.f32 %v346, %v354
        %357 = vst [vmem:[#allocation2 + $0x50] sm:$0xff] %v355
        %358 = vst [vmem:[#allocation2 + $0x58] sm:$0xff] %v356
        %359 = vrot.lane.b32.xlu0 %v229, 113
        %v360 = vpop.permute.xlu0 %359
        %361 = vrot.lane.b32.xlu0 %v230, 113
        %v362 = vpop.permute.xlu0 %361
        %vm363 = vcmask 924672
        %v364 = vsel %vm363, %v360, %v362
        %v368 = vsel %vm363, %v362, %v360
        %v369 = vlaneseq
        %v370 = vshrl.u32 %v369, 7
        %v371 = vsub.s32 6, %v370
        %v372 = vrot.slane %v231, %v371
        %v373 = vlaneseq
        %v374 = vshrl.u32 %v373, 7
        %v375 = vsub.s32 6, %v374
        %v376 = vrot.slane %v232, %v375
        %v377 = vmul.f32 %v364, %v372
        %v378 = vmul.f32 %v368, %v376
        %379 = vst [vmem:[#allocation2 + $0x60] sm:$0xff] %v377
        %380 = vst [vmem:[#allocation2 + $0x68] sm:$0xff] %v378
        %381 = vrot.lane.b32.xlu0 %v229, 112
        %v382 = vpop.permute.xlu0 %381
        %383 = vrot.lane.b32.xlu0 %v230, 112
        %v384 = vpop.permute.xlu0 %383
        %vm385 = vcmask 916480
        %v386 = vsel %vm385, %v382, %v384
        %v390 = vsel %vm385, %v384, %v382
        %v391 = vlaneseq
        %v392 = vshrl.u32 %v391, 7
        %v393 = vsub.s32 7, %v392
        %v394 = vrot.slane %v231, %v393
        %v395 = vlaneseq
        %v396 = vshrl.u32 %v395, 7
        %v397 = vsub.s32 7, %v396
        %v398 = vrot.slane %v232, %v397
        %v399 = vmul.f32 %v386, %v394
        %v400 = vmul.f32 %v390, %v398
        %401 = vst [vmem:[#allocation2 + $0x70] sm:$0xff] %v399
        %402 = vst [vmem:[#allocation2 + $0x78] sm:$0xff] %v400
        %403 = vrot.lane.b32.xlu0 %v229, 111
        %v404 = vpop.permute.xlu0 %403
        %405 = vrot.lane.b32.xlu0 %v230, 111
        %v406 = vpop.permute.xlu0 %405
        %vm407 = vcmask 908288
        %v408 = vsel %vm407, %v404, %v406
        %v412 = vsel %vm407, %v406, %v404
        %v413 = vlaneseq
        %v414 = vshrl.u32 %v413, 7
        %v415 = vsub.s32 0, %v414
        %v416 = vrot.slane %v233, %v415
        %v417 = vlaneseq
        %v418 = vshrl.u32 %v417, 7
        %v419 = vsub.s32 0, %v418
        %v420 = vrot.slane %v234, %v419
        %v421 = vmul.f32 %v408, %v416
        %v422 = vmul.f32 %v412, %v420
        %423 = vst [vmem:[#allocation2 + $0x80] sm:$0xff] %v421
        %424 = vst [vmem:[#allocation2 + $0x88] sm:$0xff] %v422
        %v425 = vld [vmem:[%s1] sm:$0xff]
        %v426 = vld [vmem:[#allocation2] sm:$0xff]
        %v427 = vld [vmem:[#allocation2 + $0x8] sm:$0xff]
        %v428 = vld [vmem:[#allocation2 + $0x10] sm:$0xff]
        %v429 = vld [vmem:[#allocation2 + $0x18] sm:$0xff]
        %v430 = vld [vmem:[#allocation2 + $0x20] sm:$0xff]
        %v431 = vld [vmem:[#allocation2 + $0x28] sm:$0xff]
        %v432 = vld [vmem:[#allocation2 + $0x30] sm:$0xff]
        %v433 = vld [vmem:[#allocation2 + $0x38] sm:$0xff]
        %v434 = vld [vmem:[#allocation2 + $0x40] sm:$0xff]
        %v435 = vld [vmem:[#allocation2 + $0x48] sm:$0xff]
        %v436 = vld [vmem:[#allocation2 + $0x50] sm:$0xff]
        %v437 = vld [vmem:[#allocation2 + $0x58] sm:$0xff]
        %v438 = vld [vmem:[#allocation2 + $0x60] sm:$0xff]
        %v439 = vld [vmem:[#allocation2 + $0x68] sm:$0xff]
        %v440 = vld [vmem:[#allocation2 + $0x70] sm:$0xff]
        %v441 = vld [vmem:[#allocation2 + $0x78] sm:$0xff]
        %v442 = vld [vmem:[#allocation2 + $0x80] sm:$0xff]
        %v443 = vld [vmem:[#allocation2 + $0x88] sm:$0xff]
        %v444 = vld [vmem:[%s2] sm:$0xff]
        %446 = vset.pattern.permute.xlu0 0
        %447 = vperm.xlu0 %446, %v444
        %v448 = vpop.permute.xlu0 %447
        %vm450 = vcmask 588800
        %v452 = vsel %vm450, %v425, 0
        %454 = vmatprep.subr.mxu0 %v427
        %455 = vmatpush1.msra.mxu0 %v426
        %456 = vmatprep.subr.mxu0 %v429
        %457 = vmatpush1.msra.mxu0 %v428
        %458 = vmatprep.subr.mxu0 %v431
        %459 = vmatpush1.msra.mxu0 %v430
        %460 = vmatprep.subr.mxu0 %v433
        %461 = vmatpush1.msra.mxu0 %v432
        %462 = vmatprep.subr.mxu0 %v435
        %463 = vmatpush1.msra.mxu0 %v434
        %464 = vmatprep.subr.mxu0 %v437
        %465 = vmatpush1.msra.mxu0 %v436
        %466 = vmatprep.subr.mxu0 %v439
        %467 = vmatpush1.msra.mxu0 %v438
        %468 = vmatprep.subr.mxu0 %v441
        %469 = vmatpush1.msra.mxu0 %v440
        %470 = vmatprep.subr.mxu0 %v443
        %471 = vmatpush1.msra.mxu0 %v442
        %472 = vmatprep.subr.mxu0 0.0
        %473 = vmatpush1.msra.mxu0 0.0
        %474 = vmatprep.subr.mxu0 0.0
        %475 = vmatpush1.msra.mxu0 0.0
        %476 = vmatprep.subr.mxu0 0.0
        %477 = vmatpush1.msra.mxu0 0.0
        %478 = vmatprep.subr.mxu0 0.0
        %479 = vmatpush1.msra.mxu0 0.0
        %480 = vmatprep.subr.mxu0 0.0
        %481 = vmatpush1.msra.mxu0 0.0
        %482 = vmatprep.subr.mxu0 0.0
        %483 = vmatpush1.msra.mxu0 0.0
        %484 = vmatprep.subr.mxu0 0.0
        %485 = vmatpush1.msra.mxu0 0.0
        %486 = vmatprep.subr.mxu0 0.0
        %487 = vmatpush1.msra.mxu0 0.0
        %488 = vmatprep.subr.mxu0 0.0
        %489 = vmatpush1.msra.mxu0 0.0
        %490 = vmatprep.subr.mxu0 0.0
        %491 = vmatpush1.msra.mxu0 0.0
        %492 = vmatprep.subr.mxu0 0.0
        %493 = vmatpush1.msra.mxu0 0.0
        %494 = vmatprep.subr.mxu0 0.0
        %495 = vmatpush1.msra.mxu0 0.0
        %496 = vmatprep.subr.mxu0 0.0
        %497 = vmatpush1.msra.mxu0 0.0
        %498 = vmatprep.subr.mxu0 0.0
        %499 = vmatpush1.msra.mxu0 0.0
        %500 = vmatprep.subr.mxu0 0.0
        %501 = vmatpush1.msra.mxu0 0.0
        %502 = vmatprep.subr.mxu0 0.0
        %503 = vmatpush1.msra.mxu0 0.0
        %504 = vmatprep.subr.mxu0 0.0
        %505 = vmatpush1.msra.mxu0 0.0
        %506 = vmatprep.subr.mxu0 0.0
        %507 = vmatpush1.msra.mxu0 0.0
        %508 = vmatprep.subr.mxu0 0.0
        %509 = vmatpush1.msra.mxu0 0.0
        %510 = vmatprep.subr.mxu0 0.0
        %511 = vmatpush1.msra.mxu0 0.0
        %512 = vmatprep.subr.mxu0 0.0
        %513 = vmatpush1.msra.mxu0 0.0
        %514 = vmatprep.subr.mxu0 0.0
        %515 = vmatpush1.msra.mxu0 0.0
        %516 = vmatprep.subr.mxu0 0.0
        %517 = vmatpush1.msra.mxu0 0.0
        %518 = vmatprep.mubr.f32.mxu0 0.0
        %519 = vmatmul.mubr.f32.gmra.mrb[0].mxu0 %v452
        %v520 = vpop.f32.mrb[0].mxu0
        %v521 = vadd.f32 %v448, %v520
        %v522 = vpop.f32.mrb[0].mxu0
        %v523 = vadd.f32 %v448, %v522
        %524 = vdwg.mxu0
        %v525 = vmax.f32 %v521, 0.0
        %v526 = vmax.f32 %v523, 0.0
        %527 = vst [vmem:[%s228] sm:$0xff] %v525
        %528 = vst [vmem:[%s228 + $0x8] sm:$0xff] %v526
        %s529 = sand.u32 %s119, 1
        %s530 = scalar_lea.sflag [#allocation5], %s529
        %s531 = sand.u32 %s119, 1
        %s532 = smul.addr %s531, 16
        %s533 = scalar_lea.vmem [#allocation8], %s532
        // Predicated region
        $region45: #{tpu_custom_call.1} parent=35 // pred_check
          %p534 = pneg %p129
        $region46: #{tpu_custom_call.1} parent=35 // pred_check_branch
          %536 = sbr.rel (%p534) target = $region48
        $region47: #{tpu_custom_call.1} parent=35 // pred_region
          %s538 = ssub.s32 256, 256
          %539 = vsyncadd %s530, %s538
          %s540 = smul.addr %s22, 2
          %s541 = smul.addr %s540, 128
          %s542 = scalar_lea.hbm %s4, %s541
          %s544 = sshll.u32 %s533, 4
          %s545 = int_to_ptr.vmem [resolvable:$true] %s544
          %547 = dma.vmem_to_hbm [thread:$0]  %s545, 256, %s542, %s530
        $region48: #{tpu_custom_call.1} parent=35 // pred_fallthru
          _
      $region36: #{tpu_custom_call.1} parent=5 // pred_fallthru
        _
      %p548 = scmp.le.s32.totalorder 2, %s17
      // Predicated region
      $region49: #{tpu_custom_call.1} parent=5 // pred_check
        %p549 = pneg %p548
      $region50: #{tpu_custom_call.1} parent=5 // pred_check_branch
        %551 = sbr.rel (%p549) target = $region52
      $region51: #{tpu_custom_call.1} parent=5 // pred_region
        %s552 = ssub.s32 %s17, 2
        // Predicated region
        $region53: #{tpu_custom_call.1} parent=51 // pred_check
          %p553 = pneg %p135
        $region54: #{tpu_custom_call.1} parent=51 // pred_check_branch
          %555 = sbr.rel (%p553) target = $region56
        $region55: #{tpu_custom_call.1} parent=51 // pred_region
          %s556 = sand.u32 %s120, 1
          %s557 = scalar_lea.sflag [#allocation5], %s556
          %s558 = sand.u32 %s120, 1
          %s559 = smul.addr %s558, 16
          %s560 = scalar_lea.vmem [#allocation8], %s559
          %561 = dma.done %s557, 256
        $region56: #{tpu_custom_call.1} parent=51 // pred_fallthru
          _
      $region52: #{tpu_custom_call.1} parent=5 // pred_fallthru
        _
    $region6: #{tpu_custom_call.1} parent=1 // loop_footer
      %s21 = sadd.s32 1, %s17
    $region7: #{tpu_custom_call.1} parent=1 // loop_footer_branch
      %16 = sbr.rel target = $region3
    $region8: #{tpu_custom_call.1} parent=1 // loop_exit
      _
    %562 = vsyncpa [#allocation4], 1
    %s563 = scalar_lea.sflag [#allocation4], 1
    %564 = vsyncpa %s563, 1
    %565 = vsyncpa [#allocation7], 1
    %566 = vsyncpa [#allocation5], 1
    %s567 = scalar_lea.sflag [#allocation5], 1
    %568 = vsyncpa %s567, 1

</llo_original>
